<compile_context>
chip_gen: v7x
topology: tpu7x:2x2x1
jax: 0.10.0
libtpu: 0.0.40
codegen_flags: <defaults>
</compile_context>

<pallas_src>
import jax
import jax.numpy as jnp
import numpy as np
from jax.experimental import pallas as pl
from jax.experimental.pallas import tpu as pltpu


def _bilinear_matrix(out_size: int, in_size: int) -> np.ndarray:
    """Separable bilinear-resize matrix R (out_size, in_size): rows_out = R @ rows_in."""
    scale = in_size / out_size
    R = np.zeros((out_size, in_size), dtype=np.float32)
    for i in range(out_size):
        s = (i + 0.5) * scale - 0.5            # align_corners=False convention
        s = min(max(s, 0.0), in_size - 1.0)
        lo = int(np.floor(s))
        hi = min(lo + 1, in_size - 1)
        w = s - lo
        R[i, lo] += 1.0 - w
        R[i, hi] += w
    return R


def _feature_kernel(x_ref, rwt_ref, rh_ref, b_ref, o_ref):
    # One grid step = one image (all channels), two batched MXU matmuls.
    #   x_ref   : (C, Hin, Win)   bf16  image channel planes
    #   rwt_ref : (C, Win, Wpad)  bf16  column-resize matrix (transposed, zero-padded to lane-dense Wpad)
    #   rh_ref  : (C, Hout, Hin)  bf16  row-resize matrix with 1/(255*std[c]) folded in
    #   b_ref   : (C, Hout, 1)    f32   -mean[c]/std[c]
    #   o_ref   : (C, Hout, Wpad) f32
    # MM1: column resize (downscale direction first keeps the intermediate minimal).
    t = jnp.einsum('cij,cjk->cik', x_ref[...], rwt_ref[...],
                   preferred_element_type=jnp.float32)        # (C, Hin, Wpad) f32
    t = t.astype(jnp.bfloat16)                                 # narrow for the second MXU pass
    # MM2: per-channel row resize; rescale/std already folded into rh_ref.
    y = jnp.einsum('coi,cik->cok', rh_ref[...], t,
                   preferred_element_type=jnp.float32)         # (C, Hout, Wpad) f32
    o_ref[...] = y + b_ref[...]                                # lane-broadcast bias add


def beit_feature_extract(images,
                         out_hw=(8, 8),
                         image_mean=(0.5, 0.5, 0.5),
                         image_std=(0.5, 0.5, 0.5),
                         vmem_limit_bytes=None):
    B, C, Hin, Win = images.shape
    Hout, Wout = out_hw
    Wpad = max(128, ((Wout + 127) // 128) * 128)   # lane-dense output width

    rh = _bilinear_matrix(Hout, Hin)               # (Hout, Hin)
    rw = _bilinear_matrix(Wout, Win)               # (Wout, Win)
    mean = np.asarray(image_mean, dtype=np.float32)
    std = np.asarray(image_std, dtype=np.float32)
    scale = (1.0 / (255.0 * std)).astype(np.float32)   # fold 1/255 rescale + 1/std
    bias = (-mean / std).astype(np.float32)

    # Column-resize matrix: transposed (no in-kernel .T), zero-padded to Wpad,
    # stacked per channel so MM1 is a clean single-batch-dim matmul.
    rw_t_pad = np.zeros((Win, Wpad), dtype=np.float32)
    rw_t_pad[:, :Wout] = rw.T
    rwt_stack = jnp.asarray(np.broadcast_to(rw_t_pad[None], (C, Win, Wpad)),
                            dtype=jnp.bfloat16)              # (C, Win, Wpad)

    # Per-channel row-resize matrices with the affine scale folded in.
    rh_stack = jnp.asarray(rh[None, :, :] * scale[:, None, None],
                           dtype=jnp.bfloat16)               # (C, Hout, Hin)

    b_col = jnp.asarray(np.broadcast_to(bias[:, None, None], (C, Hout, 1)),
                        dtype=jnp.float32)                    # (C, Hout, 1)

    # Narrow pixel slab: bf16 is exact for 0..255 integer pixel values.
    x = images if images.dtype == jnp.bfloat16 else images.astype(jnp.bfloat16)

    cp_kwargs = dict(dimension_semantics=("parallel",))
    if vmem_limit_bytes is not None:
        cp_kwargs["vmem_limit_bytes"] = int(vmem_limit_bytes)

    out = pl.pallas_call(
        _feature_kernel,
        out_shape=jax.ShapeDtypeStruct((B, C, Hout, Wpad), jnp.float32),
        grid_spec=pltpu.PrefetchScalarGridSpec(
            num_scalar_prefetch=0,
            grid=(B,),
            in_specs=[
                # Full-extent trailing dims -> exempt from the (8,128) constraint.
                pl.BlockSpec((pl.Squeezed(), C, Hin, Win), lambda b: (b, 0, 0, 0)),
                pl.BlockSpec((C, Win, Wpad), lambda b: (0, 0, 0)),
                pl.BlockSpec((C, Hout, Hin), lambda b: (0, 0, 0)),
                pl.BlockSpec((C, Hout, 1), lambda b: (0, 0, 0)),
            ],
            out_specs=pl.BlockSpec((pl.Squeezed(), C, Hout, Wpad),
                                   lambda b: (b, 0, 0, 0)),
        ),
        compiler_params=pltpu.CompilerParams(**cp_kwargs),
    )(x, rwt_stack, rh_stack, b_col)

    # Slice off the lane padding on the host; output is already NCHW.
    return out[..., :Wout]


def _reference(images, rh, rw, mean, std):
    out = jnp.einsum('oi,bcij->bcoj', rh, images)
    out = jnp.einsum('bcoj,wj->bcow', out, rw)
    out = (out / 255.0 - mean[None, :, None, None]) / std[None, :, None, None]
    return out


if __name__ == "__main__":
    key = jax.random.PRNGKey(0)
    B, C, Hin, Win = 2, 3, 16, 16
    Hout, Wout = 8, 8

    # Deterministic synthetic "image" batch: integer pixel values 0..255
    # (exact in bf16, matching uint8 image data).
    pix = jax.random.randint(key, (B, C, Hin, Win), 0, 256, dtype=jnp.int32)
    images_bf16 = pix.astype(jnp.bfloat16)
    images_f32 = pix.astype(jnp.float32)

    pixel_values = beit_feature_extract(images_bf16, out_hw=(Hout, Wout))
    pixel_values = jax.block_until_ready(pixel_values)

    # Correctness check against a pure-JAX f32 reference of the same math.
    rh = jnp.asarray(_bilinear_matrix(Hout, Hin))
    rw = jnp.asarray(_bilinear_matrix(Wout, Win))
    mean = jnp.asarray([0.5, 0.5, 0.5], dtype=jnp.float32)
    std = jnp.asarray([0.5, 0.5, 0.5], dtype=jnp.float32)
    ref = _reference(images_f32, rh, rw, mean, std)

    assert pixel_values.shape == (B, C, Hout, Wout)
    assert pixel_values.dtype == jnp.float32
    # bf16 operands / bf16 intermediate -> loosened tolerance vs the f32 reference.
    max_err = float(jnp.max(jnp.abs(pixel_values - ref)))
    assert jnp.allclose(pixel_values, ref, atol=5e-2, rtol=5e-2), max_err

    print("KERNEL_OK")
</pallas_src>

<mosaic_0001>
module attributes {stable_mosaic.version = 11 : i64} {
  func.func @_feature_kernel(%arg0: i32, %arg1: memref<1x3x16x16xbf16, #tpu.memory_space<vmem>>, %arg2: memref<3x16x128xbf16, #tpu.memory_space<vmem>>, %arg3: memref<3x8x16xbf16, #tpu.memory_space<vmem>>, %arg4: memref<3x8x1xf32, #tpu.memory_space<vmem>>, %arg5: memref<1x3x8x128xf32, #tpu.memory_space<vmem>>) attributes {dimension_semantics = [#tpu.dimension_semantics<parallel>], iteration_bounds = array<i64: 2>, scalar_prefetch = 0 : i64, scratch_operands = 0 : i64, tpu.core_type = #tpu.core_type<tc>, window_params = [{transform_indices = @transform_0, window_bounds = array<i64: 1, 3, 16, 16>}, {pipeline_mode = #tpu.pipeline_mode<synchronous>, transform_indices = @transform_1, window_bounds = array<i64: 3, 16, 128>}, {pipeline_mode = #tpu.pipeline_mode<synchronous>, transform_indices = @transform_2, window_bounds = array<i64: 3, 8, 16>}, {pipeline_mode = #tpu.pipeline_mode<synchronous>, transform_indices = @transform_3, window_bounds = array<i64: 3, 8, 1>}, {transform_indices = @transform_4, window_bounds = array<i64: 1, 3, 8, 128>}]} {
    %c0 = arith.constant 0 : index
    %c0_0 = arith.constant 0 : index
    %c0_1 = arith.constant 0 : index
    %c0_2 = arith.constant 0 : index
    %0 = vector.load %arg1[%c0, %c0_0, %c0_1, %c0_2] : memref<1x3x16x16xbf16, #tpu.memory_space<vmem>>, vector<1x3x16x16xbf16>
    %1 = vector.shape_cast %0 : vector<1x3x16x16xbf16> to vector<3x16x16xbf16>
    %c0_3 = arith.constant 0 : index
    %c0_4 = arith.constant 0 : index
    %c0_5 = arith.constant 0 : index
    %2 = vector.load %arg2[%c0_3, %c0_4, %c0_5] : memref<3x16x128xbf16, #tpu.memory_space<vmem>>, vector<3x16x128xbf16>
    "tpu.trace_start"() <{level = 10 : i32, message = "cij,cjk->cik"}> : () -> ()
    %cst = arith.constant dense<0.000000e+00> : vector<3x16x128xf32>
    %3 = tpu.matmul %1, %2, %cst {dimension_numbers = #tpu.dot_dimension_numbers<[2], [1], [1], [2], [0, 0, 0, 1, 1, 2], [0], [0]>} : vector<3x16x16xbf16>, vector<3x16x128xbf16>, vector<3x16x128xf32> -> vector<3x16x128xf32>
    "tpu.trace_stop"() : () -> ()
    %4 = arith.truncf %3 : vector<3x16x128xf32> to vector<3x16x128xbf16>
    %c0_6 = arith.constant 0 : index
    %c0_7 = arith.constant 0 : index
    %c0_8 = arith.constant 0 : index
    %5 = vector.load %arg3[%c0_6, %c0_7, %c0_8] : memref<3x8x16xbf16, #tpu.memory_space<vmem>>, vector<3x8x16xbf16>
    "tpu.trace_start"() <{level = 10 : i32, message = "coi,cik->cok"}> : () -> ()
    %cst_9 = arith.constant dense<0.000000e+00> : vector<3x8x128xf32>
    %6 = tpu.matmul %5, %4, %cst_9 {dimension_numbers = #tpu.dot_dimension_numbers<[2], [1], [1], [2], [0, 0, 0, 1, 1, 2], [0], [0]>} : vector<3x8x16xbf16>, vector<3x16x128xbf16>, vector<3x8x128xf32> -> vector<3x8x128xf32>
    "tpu.trace_stop"() : () -> ()
    %c0_10 = arith.constant 0 : index
    %c0_11 = arith.constant 0 : index
    %c0_12 = arith.constant 0 : index
    %7 = vector.load %arg4[%c0_10, %c0_11, %c0_12] : memref<3x8x1xf32, #tpu.memory_space<vmem>>, vector<3x8x1xf32>
    %8 = vector.broadcast %7 : vector<3x8x1xf32> to vector<3x8x128xf32>
    %9 = arith.addf %6, %8 : vector<3x8x128xf32>
    %c0_13 = arith.constant 0 : index
    %c0_14 = arith.constant 0 : index
    %c0_15 = arith.constant 0 : index
    %c0_16 = arith.constant 0 : index
    %10 = vector.load %arg5[%c0_13, %c0_14, %c0_15, %c0_16] : memref<1x3x8x128xf32, #tpu.memory_space<vmem>>, vector<1x3x8x128xf32>
    %11 = vector.shape_cast %10 : vector<1x3x8x128xf32> to vector<3x8x128xf32>
    %12 = vector.shape_cast %9 : vector<3x8x128xf32> to vector<1x3x8x128xf32>
    tpu.vector_store %arg5[%c0_13, %c0_14, %c0_15, %c0_16], %12 {strides = array<i32>} : memref<1x3x8x128xf32, #tpu.memory_space<vmem>>, vector<1x3x8x128xf32>,
    return
  }
  func.func @transform_0(%arg0: i32) -> (i32, i32, i32, i32) {
    %c0_i32 = arith.constant 0 : i32
    %c0_i32_0 = arith.constant 0 : i32
    %c0_i32_1 = arith.constant 0 : i32
    %c0_i32_2 = arith.constant 0 : i32
    return %arg0, %c0_i32, %c0_i32_0, %c0_i32_1 : i32, i32, i32, i32
  }
  func.func @transform_1(%arg0: i32) -> (i32, i32, i32) {
    %c0_i32 = arith.constant 0 : i32
    %c0_i32_0 = arith.constant 0 : i32
    %c0_i32_1 = arith.constant 0 : i32
    %c0_i32_2 = arith.constant 0 : i32
    return %c0_i32, %c0_i32_0, %c0_i32_1 : i32, i32, i32
  }
  func.func @transform_2(%arg0: i32) -> (i32, i32, i32) {
    %c0_i32 = arith.constant 0 : i32
    %c0_i32_0 = arith.constant 0 : i32
    %c0_i32_1 = arith.constant 0 : i32
    %c0_i32_2 = arith.constant 0 : i32
    return %c0_i32, %c0_i32_0, %c0_i32_1 : i32, i32, i32
  }
  func.func @transform_3(%arg0: i32) -> (i32, i32, i32) {
    %c0_i32 = arith.constant 0 : i32
    %c0_i32_0 = arith.constant 0 : i32
    %c0_i32_1 = arith.constant 0 : i32
    %c0_i32_2 = arith.constant 0 : i32
    return %c0_i32, %c0_i32_0, %c0_i32_1 : i32, i32, i32
  }
  func.func @transform_4(%arg0: i32) -> (i32, i32, i32, i32) {
    %c0_i32 = arith.constant 0 : i32
    %c0_i32_0 = arith.constant 0 : i32
    %c0_i32_1 = arith.constant 0 : i32
    %c0_i32_2 = arith.constant 0 : i32
    return %arg0, %c0_i32, %c0_i32_0, %c0_i32_1 : i32, i32, i32, i32
  }
}

</mosaic_0001>

<llo_original>
// kernel: tpu_custom_call.1
$region0: #{tpu_custom_call.1}
  #allocation0 [shape = 'u32[]', space=smem, size = 0x4, offset = 0x4, fixed_abs, tag = 'smem constant byte address 0x4 - core index']
  #allocation1 [shape = 'u32[144,128]{1,0:T(1,128)}', space=vmem, size = 0x12000, scoped, tag = 'internal scratch']
  %s0 = inlined_call_operand.hbm [shape: bf16[2,3,16,16], index: 0, kind: input, shape index: {}]
  %s1 = inlined_call_operand.vmem [shape: bf16[3,16,128], index: 1, kind: input, shape index: {}]
  %s2 = inlined_call_operand.hbm [shape: bf16[3,8,16], index: 2, kind: input, shape index: {}]
  %s3 = inlined_call_operand.vmem [shape: f32[3,8,1], index: 3, kind: input, shape index: {}]
  %s4 = inlined_call_operand.hbm [shape: f32[2,3,8,128], index: 4, kind: output, shape index: {}]
  %s5 = sld [smem:[#allocation0]]
  $region57: #{tpu_custom_call.1} parent=0
    _
  %s7 = ssub.s32 1, %s5
  %s8 = scalar_select 0, %s7, %s5
  $region1: #{tpu_custom_call.1} parent=0
    #allocation2 [shape = 'u8[24576]{0}', space=vmem, size = 0x6000, scoped, tag = 'input window, operand 0']
    #allocation3 [shape = 's32[2]{0}', space=sflag, size = 0x8, scoped, tag = 'scoped memory for tpu_custom_call.1']
    #allocation4 [shape = 's32[2]{0}', space=sflag, size = 0x8, scoped, tag = 'scoped memory for tpu_custom_call.1']
    #allocation5 [shape = 'u8[6144]{0}', space=vmem, size = 0x1800, scoped, tag = 'input window, operand 2, single buffered']
    #allocation6 [shape = 's32[1]{0}', space=sflag, size = 0x4, scoped, tag = 'scoped memory for tpu_custom_call.1']
    #allocation7 [shape = 'u8[24576]{0}', space=vmem, size = 0x6000, scoped, tag = 'output window, operand 0']
    %9 = vsyncpa [#allocation3], 0
    %s10 = scalar_lea.sflag [#allocation3], 1
    %11 = vsyncpa %s10, 0
    %12 = vsyncpa [#allocation6], 0
    %13 = vsyncpa [#allocation4], 0
    %s14 = scalar_lea.sflag [#allocation4], 1
    %15 = vsyncpa %s14, 0
    loop: start=0, step=1, limit=4
    $region2: #{tpu_custom_call.1} parent=1 // loop_pre_header
      _
    $region3: #{tpu_custom_call.1} parent=1 // loop_header
      %s17 = sphi 0, %s21
      %p18 = scmp.ge.s32.totalorder %s17, 4
      %s27 = sphi 0, %s29
      %s30 = sphi 0, %s27
      %s31 = sphi 0, %s30
      %s47 = sphi 0, %s31
      %s51 = sphi 0, %s51
      %s53 = sphi 0, %s51
      %s54 = sphi 0, %s53
      %s68 = sphi 0, %s54
      %s72 = sphi 0, %s72
      %s74 = sphi 0, %s72
      %s75 = sphi 0, %s74
      %s89 = sphi 0, %s75
      %s93 = sphi 0, %s93
      %s95 = sphi 0, %s93
      %s96 = sphi 0, %s95
      %s110 = sphi 0, %s96
      %s116 = sphi 0, %s118
      %s119 = sphi 0, %s116
      %s120 = sphi 0, %s119
      %s136 = sphi 0, %s120
    $region4: #{tpu_custom_call.1} parent=1 // loop_header_branch
      %20 = sbr.rel (%p18) target = $region8
    $region5: #{tpu_custom_call.1} parent=1 // loop_body
      %s22 = ssub.s32 %s17, 1
      %s23 = ssub.s32 %s17, 2
      %s24 = sadd.s32 %s17, 1
      %s25 = ssub.s32 %s17, %s24
      %p26 = scmp.eq.s32.totalorder %s25, 0
      %s28 = sadd.s32 %s27, 1
      %s29 = scalar_select %p26, %s27, %s28
      %p32 = pneg %p26
      %p33 = scmp.eq.s32.totalorder %s17, 1
      %p34 = por %p32, %p33
      %p35 = scmp.ne.s32.totalorder %s27, %s30
      %p36 = scmp.eq.s32.totalorder %s17, 0
      %p37 = por %p35, %p36
      %p38 = scmp.ne.s32.totalorder %s27, %s30
      %p39 = scmp.eq.s32.totalorder %s22, 1
      %p40 = por %p38, %p39
      %p41 = scmp.ne.s32.totalorder %s30, %s31
      %p42 = scmp.eq.s32.totalorder %s22, 0
      %p43 = por %p41, %p42
      %p44 = scmp.ne.s32.totalorder %s30, %s31
      %p45 = scmp.eq.s32.totalorder %s23, 1
      %p46 = por %p44, %p45
      %p48 = scmp.ne.s32.totalorder %s31, %s47
      %p49 = scmp.eq.s32.totalorder %s23, 0
      %p50 = por %p48, %p49
      %s52 = sadd.s32 %s51, 1
      %p55 = scmp.eq.s32.totalorder %s17, 1
      %p56 = scmp.ne.s32.totalorder %s51, %s53
      %p57 = scmp.eq.s32.totalorder %s17, 0
      %p58 = por %p56, %p57
      %p59 = scmp.ne.s32.totalorder %s51, %s53
      %p60 = scmp.eq.s32.totalorder %s22, 1
      %p61 = por %p59, %p60
      %p62 = scmp.ne.s32.totalorder %s53, %s54
      %p63 = scmp.eq.s32.totalorder %s22, 0
      %p64 = por %p62, %p63
      %p65 = scmp.ne.s32.totalorder %s53, %s54
      %p66 = scmp.eq.s32.totalorder %s23, 1
      %p67 = por %p65, %p66
      %p69 = scmp.ne.s32.totalorder %s54, %s68
      %p70 = scmp.eq.s32.totalorder %s23, 0
      %p71 = por %p69, %p70
      %s73 = sadd.s32 %s72, 1
      %p76 = scmp.eq.s32.totalorder %s17, 1
      %p77 = scmp.ne.s32.totalorder %s72, %s74
      %p78 = scmp.eq.s32.totalorder %s17, 0
      %p79 = por %p77, %p78
      %p80 = scmp.ne.s32.totalorder %s72, %s74
      %p81 = scmp.eq.s32.totalorder %s22, 1
      %p82 = por %p80, %p81
      %p83 = scmp.ne.s32.totalorder %s74, %s75
      %p84 = scmp.eq.s32.totalorder %s22, 0
      %p85 = por %p83, %p84
      %p86 = scmp.ne.s32.totalorder %s74, %s75
      %p87 = scmp.eq.s32.totalorder %s23, 1
      %p88 = por %p86, %p87
      %p90 = scmp.ne.s32.totalorder %s75, %s89
      %p91 = scmp.eq.s32.totalorder %s23, 0
      %p92 = por %p90, %p91
      %s94 = sadd.s32 %s93, 1
      %p97 = scmp.eq.s32.totalorder %s17, 1
      %p98 = scmp.ne.s32.totalorder %s93, %s95
      %p99 = scmp.eq.s32.totalorder %s17, 0
      %p100 = por %p98, %p99
      %p101 = scmp.ne.s32.totalorder %s93, %s95
      %p102 = scmp.eq.s32.totalorder %s22, 1
      %p103 = por %p101, %p102
      %p104 = scmp.ne.s32.totalorder %s95, %s96
      %p105 = scmp.eq.s32.totalorder %s22, 0
      %p106 = por %p104, %p105
      %p107 = scmp.ne.s32.totalorder %s95, %s96
      %p108 = scmp.eq.s32.totalorder %s23, 1
      %p109 = por %p107, %p108
      %p111 = scmp.ne.s32.totalorder %s96, %s110
      %p112 = scmp.eq.s32.totalorder %s23, 0
      %p113 = por %p111, %p112
      %s114 = ssub.s32 %s17, %s24
      %p115 = scmp.eq.s32.totalorder %s114, 0
      %s117 = sadd.s32 %s116, 1
      %s118 = scalar_select %p115, %s116, %s117
      %p121 = pneg %p115
      %p122 = scmp.eq.s32.totalorder %s17, 1
      %p123 = por %p121, %p122
      %p124 = scmp.ne.s32.totalorder %s116, %s119
      %p125 = scmp.eq.s32.totalorder %s17, 0
      %p126 = por %p124, %p125
      %p127 = scmp.ne.s32.totalorder %s116, %s119
      %p128 = scmp.eq.s32.totalorder %s22, 1
      %p129 = por %p127, %p128
      %p130 = scmp.ne.s32.totalorder %s119, %s120
      %p131 = scmp.eq.s32.totalorder %s22, 0
      %p132 = por %p130, %p131
      %p133 = scmp.ne.s32.totalorder %s119, %s120
      %p134 = scmp.eq.s32.totalorder %s23, 1
      %p135 = por %p133, %p134
      %p137 = scmp.ne.s32.totalorder %s120, %s136
      %p138 = scmp.eq.s32.totalorder %s23, 0
      %p139 = por %p137, %p138
      %p140 = scmp.le.s32.totalorder 1, %s17
      %p141 = scmp.lt.s32.totalorder %s17, 3
      %p142 = pnand %p140, %p141
      %p143 = pneg %p142
      // Predicated region
      $region9: #{tpu_custom_call.1} parent=5 // pred_check
        _
      $region10: #{tpu_custom_call.1} parent=5 // pred_check_branch
        %145 = sbr.rel (%p142) target = $region12
      $region11: #{tpu_custom_call.1} parent=5 // pred_region
        %s146 = ssub.s32 %s17, 1
        // Predicated region
        $region13: #{tpu_custom_call.1} parent=11 // pred_check
          %p147 = pneg %p64
        $region14: #{tpu_custom_call.1} parent=11 // pred_check_branch
          %149 = sbr.rel (%p147) target = $region16
        $region15: #{tpu_custom_call.1} parent=11 // pred_region
          _
        $region16: #{tpu_custom_call.1} parent=11 // pred_fallthru
          _
        // Predicated region
        $region17: #{tpu_custom_call.1} parent=11 // pred_check
          %p150 = pneg %p85
        $region18: #{tpu_custom_call.1} parent=11 // pred_check_branch
          %152 = sbr.rel (%p150) target = $region20
        $region19: #{tpu_custom_call.1} parent=11 // pred_region
          %s154 = ssub.s32 192, 192
          %155 = vsyncadd [#allocation6], %s154
          %s156 = sshll.u32 [#allocation5], 4
          %s157 = int_to_ptr.vmem [resolvable:$true] %s156
          %162 = dma.hbm_to_vmem [thread:$0]  %s2, 192, %s157, [#allocation6], 64, 64, 4
        $region20: #{tpu_custom_call.1} parent=11 // pred_fallthru
          _
        // Predicated region
        $region21: #{tpu_custom_call.1} parent=11 // pred_check
          %p163 = pneg %p106
        $region22: #{tpu_custom_call.1} parent=11 // pred_check_branch
          %165 = sbr.rel (%p163) target = $region24
        $region23: #{tpu_custom_call.1} parent=11 // pred_region
          _
        $region24: #{tpu_custom_call.1} parent=11 // pred_fallthru
          _
      $region12: #{tpu_custom_call.1} parent=5 // pred_fallthru
        _
      %p166 = scmp.lt.s32.totalorder %s17, 2
      // Predicated region
      $region25: #{tpu_custom_call.1} parent=5 // pred_check
        %p167 = pneg %p166
      $region26: #{tpu_custom_call.1} parent=5 // pred_check_branch
        %169 = sbr.rel (%p167) target = $region28
      $region27: #{tpu_custom_call.1} parent=5 // pred_region
        // Predicated region
        $region29: #{tpu_custom_call.1} parent=27 // pred_check
          %p170 = pneg %p37
        $region30: #{tpu_custom_call.1} parent=27 // pred_check_branch
          %172 = sbr.rel (%p170) target = $region32
        $region31: #{tpu_custom_call.1} parent=27 // pred_region
          %s173 = sand.u32 %s27, 1
          %s174 = scalar_lea.sflag [#allocation3], %s173
          %s175 = sand.u32 %s27, 1
          %s176 = smul.addr %s175, 24
          %s177 = scalar_lea.vmem [#allocation2], %s176
          %s179 = ssub.s32 384, 384
          %180 = vsyncadd %s174, %s179
          %s181 = smul.addr %s17, 6
          %s182 = smul.addr %s181, 64
          %s183 = scalar_lea.hbm %s0, %s182
          %s184 = sshll.u32 %s177, 4
          %s185 = int_to_ptr.vmem [resolvable:$true] %s184
          %190 = dma.hbm_to_vmem [thread:$0]  %s183, 384, %s185, %s174, 64, 64, 4
        $region32: #{tpu_custom_call.1} parent=27 // pred_fallthru
          _
      $region28: #{tpu_custom_call.1} parent=5 // pred_fallthru
        _
      %p191 = scmp.le.s32.totalorder 1, %s17
      %p192 = scmp.lt.s32.totalorder %s17, 3
      %p193 = pnand %p191, %p192
      %p194 = pneg %p193
      // Predicated region
      $region33: #{tpu_custom_call.1} parent=5 // pred_check
        _
      $region34: #{tpu_custom_call.1} parent=5 // pred_check_branch
        %196 = sbr.rel (%p193) target = $region36
      $region35: #{tpu_custom_call.1} parent=5 // pred_region
        %s197 = ssub.s32 %s17, 1
        %s198 = sand.u32 %s30, 1
        %s199 = scalar_lea.sflag [#allocation3], %s198
        %s200 = sand.u32 %s30, 1
        %s201 = smul.addr %s200, 24
        %s202 = scalar_lea.vmem [#allocation2], %s201
        // Predicated region
        $region37: #{tpu_custom_call.1} parent=35 // pred_check
          %p203 = pneg %p43
        $region38: #{tpu_custom_call.1} parent=35 // pred_check_branch
          %205 = sbr.rel (%p203) target = $region40
        $region39: #{tpu_custom_call.1} parent=35 // pred_region
          %206 = dma.done %s199, 384
        $region40: #{tpu_custom_call.1} parent=35 // pred_fallthru
          _
        // Predicated region
        $region41: #{tpu_custom_call.1} parent=35 // pred_check
          %p207 = pneg %p85
        $region42: #{tpu_custom_call.1} parent=35 // pred_check_branch
          %209 = sbr.rel (%p207) target = $region44
        $region43: #{tpu_custom_call.1} parent=35 // pred_region
          %210 = dma.done [#allocation6], 192
        $region44: #{tpu_custom_call.1} parent=35 // pred_fallthru
          _
        %s211 = sand.u32 %s30, 1
        %s212 = scalar_lea.sflag [#allocation3], %s211
        %s213 = sand.u32 %s30, 1
        %s214 = smul.addr %s213, 24
        %s215 = scalar_lea.vmem [#allocation2], %s214
        %p216 = pneg %p43
        %p217 = pneg %p40
        %p218 = pneg %p64
        %p219 = pneg %p61
        %p220 = pneg %p85
        %p221 = pneg %p82
        %p222 = pneg %p106
        %p223 = pneg %p103
        %p224 = pneg %p132
        %p225 = pneg %p129
        %s226 = sand.u32 %s119, 1
        %s227 = scalar_lea.sflag [#allocation4], %s226
        %s228 = sand.u32 %s119, 1
        %s229 = smul.addr %s228, 24
        %s230 = scalar_lea.vmem [#allocation7], %s229
        %v232 = vld [vmem:[%s202] sm:$0xf]
        %v233 = vld [vmem:[%s202 + $0x4] sm:$0xf]
        %v234 = vld [vmem:[%s202 + $0x8] sm:$0xf]
        %v235 = vld [vmem:[%s202 + $0xc] sm:$0xf]
        %v236 = vld [vmem:[%s202 + $0x10] sm:$0xf]
        %v237 = vld [vmem:[%s202 + $0x14] sm:$0xf]
        %v238 = vld [vmem:[%s1] sm:$0xf]
        %v239 = vld [vmem:[%s1 + $0x4] sm:$0xf]
        %v240 = vld [vmem:[%s1 + $0x8] sm:$0xf]
        %v241 = vld [vmem:[%s1 + $0xc] sm:$0xf]
        %v242 = vld [vmem:[%s1 + $0x10] sm:$0xf]
        %v243 = vld [vmem:[%s1 + $0x14] sm:$0xf]
        %v246 = vunpack.c.l.b16 %v232
        %v247 = vunpack.c.l.b16 %v233
        %v248 = vpack.c.b16 %v247, %v246
        %v251 = vunpack.c.l.b16 %v238
        %v252 = vunpack.c.l.b16 %v239
        %v253 = vpack.c.b16 %v252, %v251
        %vm255 = vcmask 130048
        %v257 = vsel %vm255, %v248, 0
        %259 = vmatprep.subr.bf16.mxu0 0
        %260 = vmatpush1.bf16.msra.mxu0 %v253
        %261 = vmatprep.subr.bf16.mxu0 0
        %262 = vmatpush1.bf16.msra.mxu0 0
        %263 = vmatprep.subr.bf16.mxu0 0
        %264 = vmatpush1.bf16.msra.mxu0 0
        %265 = vmatprep.subr.bf16.mxu0 0
        %266 = vmatpush1.bf16.msra.mxu0 0
        %267 = vmatprep.subr.bf16.mxu0 0
        %268 = vmatpush1.bf16.msra.mxu0 0
        %269 = vmatprep.subr.bf16.mxu0 0
        %270 = vmatpush1.bf16.msra.mxu0 0
        %271 = vmatprep.subr.bf16.mxu0 0
        %272 = vmatpush1.bf16.msra.mxu0 0
        %273 = vmatprep.subr.bf16.mxu0 0
        %274 = vmatpush1.bf16.msra.mxu0 0
        %275 = vmatprep.subr.bf16.mxu0 0
        %276 = vmatpush1.bf16.msra.mxu0 0
        %277 = vmatprep.subr.bf16.mxu0 0
        %278 = vmatpush1.bf16.msra.mxu0 0
        %279 = vmatprep.subr.bf16.mxu0 0
        %280 = vmatpush1.bf16.msra.mxu0 0
        %281 = vmatprep.subr.bf16.mxu0 0
        %282 = vmatpush1.bf16.msra.mxu0 0
        %283 = vmatprep.subr.bf16.mxu0 0
        %284 = vmatpush1.bf16.msra.mxu0 0
        %285 = vmatprep.subr.bf16.mxu0 0
        %286 = vmatpush1.bf16.msra.mxu0 0
        %287 = vmatprep.subr.bf16.mxu0 0
        %288 = vmatpush1.bf16.msra.mxu0 0
        %289 = vmatprep.subr.bf16.mxu0 0
        %290 = vmatpush1.bf16.msra.mxu0 0
        %291 = vmatprep.mubr.bf16.mxu0 0
        %292 = vmatmul.mubr.bf16.gmra.mrb[0].mxu0 %v257
        %v293 = vpop.f32.mrb[0].mxu0
        %v294 = vadd.f32 0.0, %v293
        %v295 = vpop.f32.mrb[0].mxu0
        %v296 = vpop.f32.mrb[0].mxu0
        %v297 = vadd.f32 0.0, %v296
        %v298 = vpop.f32.mrb[0].mxu0
        %299 = vdwg.mxu0
        %v302 = vunpack.c.l.b16 %v234
        %v303 = vunpack.c.l.b16 %v235
        %v304 = vpack.c.b16 %v303, %v302
        %v307 = vunpack.c.l.b16 %v240
        %v308 = vunpack.c.l.b16 %v241
        %v309 = vpack.c.b16 %v308, %v307
        %v312 = vsel %vm255, %v304, 0
        %314 = vmatprep.subr.bf16.mxu0 0
        %315 = vmatpush1.bf16.msra.mxu0 %v309
        %316 = vmatprep.subr.bf16.mxu0 0
        %317 = vmatpush1.bf16.msra.mxu0 0
        %318 = vmatprep.subr.bf16.mxu0 0
        %319 = vmatpush1.bf16.msra.mxu0 0
        %320 = vmatprep.subr.bf16.mxu0 0
        %321 = vmatpush1.bf16.msra.mxu0 0
        %322 = vmatprep.subr.bf16.mxu0 0
        %323 = vmatpush1.bf16.msra.mxu0 0
        %324 = vmatprep.subr.bf16.mxu0 0
        %325 = vmatpush1.bf16.msra.mxu0 0
        %326 = vmatprep.subr.bf16.mxu0 0
        %327 = vmatpush1.bf16.msra.mxu0 0
        %328 = vmatprep.subr.bf16.mxu0 0
        %329 = vmatpush1.bf16.msra.mxu0 0
        %330 = vmatprep.subr.bf16.mxu0 0
        %331 = vmatpush1.bf16.msra.mxu0 0
        %332 = vmatprep.subr.bf16.mxu0 0
        %333 = vmatpush1.bf16.msra.mxu0 0
        %334 = vmatprep.subr.bf16.mxu0 0
        %335 = vmatpush1.bf16.msra.mxu0 0
        %336 = vmatprep.subr.bf16.mxu0 0
        %337 = vmatpush1.bf16.msra.mxu0 0
        %338 = vmatprep.subr.bf16.mxu0 0
        %339 = vmatpush1.bf16.msra.mxu0 0
        %340 = vmatprep.subr.bf16.mxu0 0
        %341 = vmatpush1.bf16.msra.mxu0 0
        %342 = vmatprep.subr.bf16.mxu0 0
        %343 = vmatpush1.bf16.msra.mxu0 0
        %344 = vmatprep.subr.bf16.mxu0 0
        %345 = vmatpush1.bf16.msra.mxu0 0
        %346 = vmatprep.mubr.bf16.mxu0 0
        %347 = vmatmul.mubr.bf16.gmra.mrb[0].mxu0 %v312
        %v348 = vpop.f32.mrb[0].mxu0
        %v349 = vadd.f32 0.0, %v348
        %v350 = vpop.f32.mrb[0].mxu0
        %v351 = vpop.f32.mrb[0].mxu0
        %v352 = vadd.f32 0.0, %v351
        %v353 = vpop.f32.mrb[0].mxu0
        %354 = vdwg.mxu0
        %v357 = vunpack.c.l.b16 %v236
        %v358 = vunpack.c.l.b16 %v237
        %v359 = vpack.c.b16 %v358, %v357
        %v362 = vunpack.c.l.b16 %v242
        %v363 = vunpack.c.l.b16 %v243
        %v364 = vpack.c.b16 %v363, %v362
        %v367 = vsel %vm255, %v359, 0
        %369 = vmatprep.subr.bf16.mxu0 0
        %370 = vmatpush1.bf16.msra.mxu0 %v364
        %371 = vmatprep.subr.bf16.mxu0 0
        %372 = vmatpush1.bf16.msra.mxu0 0
        %373 = vmatprep.subr.bf16.mxu0 0
        %374 = vmatpush1.bf16.msra.mxu0 0
        %375 = vmatprep.subr.bf16.mxu0 0
        %376 = vmatpush1.bf16.msra.mxu0 0
        %377 = vmatprep.subr.bf16.mxu0 0
        %378 = vmatpush1.bf16.msra.mxu0 0
        %379 = vmatprep.subr.bf16.mxu0 0
        %380 = vmatpush1.bf16.msra.mxu0 0
        %381 = vmatprep.subr.bf16.mxu0 0
        %382 = vmatpush1.bf16.msra.mxu0 0
        %383 = vmatprep.subr.bf16.mxu0 0
        %384 = vmatpush1.bf16.msra.mxu0 0
        %385 = vmatprep.subr.bf16.mxu0 0
        %386 = vmatpush1.bf16.msra.mxu0 0
        %387 = vmatprep.subr.bf16.mxu0 0
        %388 = vmatpush1.bf16.msra.mxu0 0
        %389 = vmatprep.subr.bf16.mxu0 0
        %390 = vmatpush1.bf16.msra.mxu0 0
        %391 = vmatprep.subr.bf16.mxu0 0
        %392 = vmatpush1.bf16.msra.mxu0 0
        %393 = vmatprep.subr.bf16.mxu0 0
        %394 = vmatpush1.bf16.msra.mxu0 0
        %395 = vmatprep.subr.bf16.mxu0 0
        %396 = vmatpush1.bf16.msra.mxu0 0
        %397 = vmatprep.subr.bf16.mxu0 0
        %398 = vmatpush1.bf16.msra.mxu0 0
        %399 = vmatprep.subr.bf16.mxu0 0
        %400 = vmatpush1.bf16.msra.mxu0 0
        %401 = vmatprep.mubr.bf16.mxu0 0
        %402 = vmatmul.mubr.bf16.gmra.mrb[0].mxu0 %v367
        %v403 = vpop.f32.mrb[0].mxu0
        %v404 = vadd.f32 0.0, %v403
        %v405 = vpop.f32.mrb[0].mxu0
        %v406 = vpop.f32.mrb[0].mxu0
        %v407 = vadd.f32 0.0, %v406
        %v408 = vpop.f32.mrb[0].mxu0
        %409 = vdwg.mxu0
        %v410 = vpack.c.bf16 %v297, %v294
        %v411 = vpack.c.bf16 %v352, %v349
        %v412 = vpack.c.bf16 %v407, %v404
        %v413 = vld [vmem:[#allocation5] sm:$0xf]
        %v414 = vld [vmem:[#allocation5 + $0x4] sm:$0xf]
        %v415 = vld [vmem:[#allocation5 + $0x8] sm:$0xf]
        %v416 = vld [vmem:[%s3] sm:$0xff]
        %v417 = vld [vmem:[%s3 + $0x8] sm:$0xff]
        %v418 = vld [vmem:[%s3 + $0x10] sm:$0xff]
        %420 = vset.pattern.permute.xlu0 0
        %421 = vperm.xlu0 %420, %v416
        %v422 = vpop.permute.xlu0 %421
        %425 = vset.pattern.permute.xlu0 0
        %426 = vperm.xlu0 %425, %v417
        %v427 = vpop.permute.xlu0 %426
        %430 = vset.pattern.permute.xlu0 0
        %431 = vperm.xlu0 %430, %v418
        %v432 = vpop.permute.xlu0 %431
        %v435 = vsel %vm255, %v413, 0
        %437 = vmatprep.subr.bf16.mxu0 0
        %438 = vmatpush1.bf16.msra.mxu0 %v410
        %439 = vmatprep.subr.bf16.mxu0 0
        %440 = vmatpush1.bf16.msra.mxu0 0
        %441 = vmatprep.subr.bf16.mxu0 0
        %442 = vmatpush1.bf16.msra.mxu0 0
        %443 = vmatprep.subr.bf16.mxu0 0
        %444 = vmatpush1.bf16.msra.mxu0 0
        %445 = vmatprep.subr.bf16.mxu0 0
        %446 = vmatpush1.bf16.msra.mxu0 0
        %447 = vmatprep.subr.bf16.mxu0 0
        %448 = vmatpush1.bf16.msra.mxu0 0
        %449 = vmatprep.subr.bf16.mxu0 0
        %450 = vmatpush1.bf16.msra.mxu0 0
        %451 = vmatprep.subr.bf16.mxu0 0
        %452 = vmatpush1.bf16.msra.mxu0 0
        %453 = vmatprep.subr.bf16.mxu0 0
        %454 = vmatpush1.bf16.msra.mxu0 0
        %455 = vmatprep.subr.bf16.mxu0 0
        %456 = vmatpush1.bf16.msra.mxu0 0
        %457 = vmatprep.subr.bf16.mxu0 0
        %458 = vmatpush1.bf16.msra.mxu0 0
        %459 = vmatprep.subr.bf16.mxu0 0
        %460 = vmatpush1.bf16.msra.mxu0 0
        %461 = vmatprep.subr.bf16.mxu0 0
        %462 = vmatpush1.bf16.msra.mxu0 0
        %463 = vmatprep.subr.bf16.mxu0 0
        %464 = vmatpush1.bf16.msra.mxu0 0
        %465 = vmatprep.subr.bf16.mxu0 0
        %466 = vmatpush1.bf16.msra.mxu0 0
        %467 = vmatprep.subr.bf16.mxu0 0
        %468 = vmatpush1.bf16.msra.mxu0 0
        %469 = vmatprep.mubr.bf16.mxu0 0
        %470 = vmatmul.mubr.bf16.gmra.mrb[0].mxu0 %v435
        %v471 = vpop.f32.mrb[0].mxu0
        %v472 = vadd.f32 %v422, %v471
        %v473 = vpop.f32.mrb[0].mxu0
        %v474 = vpop.f32.mrb[0].mxu0
        %v475 = vpop.f32.mrb[0].mxu0
        %476 = vdwg.mxu0
        %v478 = vsel %vm255, %v414, 0
        %480 = vmatprep.subr.bf16.mxu0 0
        %481 = vmatpush1.bf16.msra.mxu0 %v411
        %482 = vmatprep.subr.bf16.mxu0 0
        %483 = vmatpush1.bf16.msra.mxu0 0
        %484 = vmatprep.subr.bf16.mxu0 0
        %485 = vmatpush1.bf16.msra.mxu0 0
        %486 = vmatprep.subr.bf16.mxu0 0
        %487 = vmatpush1.bf16.msra.mxu0 0
        %488 = vmatprep.subr.bf16.mxu0 0
        %489 = vmatpush1.bf16.msra.mxu0 0
        %490 = vmatprep.subr.bf16.mxu0 0
        %491 = vmatpush1.bf16.msra.mxu0 0
        %492 = vmatprep.subr.bf16.mxu0 0
        %493 = vmatpush1.bf16.msra.mxu0 0
        %494 = vmatprep.subr.bf16.mxu0 0
        %495 = vmatpush1.bf16.msra.mxu0 0
        %496 = vmatprep.subr.bf16.mxu0 0
        %497 = vmatpush1.bf16.msra.mxu0 0
        %498 = vmatprep.subr.bf16.mxu0 0
        %499 = vmatpush1.bf16.msra.mxu0 0
        %500 = vmatprep.subr.bf16.mxu0 0
        %501 = vmatpush1.bf16.msra.mxu0 0
        %502 = vmatprep.subr.bf16.mxu0 0
        %503 = vmatpush1.bf16.msra.mxu0 0
        %504 = vmatprep.subr.bf16.mxu0 0
        %505 = vmatpush1.bf16.msra.mxu0 0
        %506 = vmatprep.subr.bf16.mxu0 0
        %507 = vmatpush1.bf16.msra.mxu0 0
        %508 = vmatprep.subr.bf16.mxu0 0
        %509 = vmatpush1.bf16.msra.mxu0 0
        %510 = vmatprep.subr.bf16.mxu0 0
        %511 = vmatpush1.bf16.msra.mxu0 0
        %512 = vmatprep.mubr.bf16.mxu0 0
        %513 = vmatmul.mubr.bf16.gmra.mrb[0].mxu0 %v478
        %v514 = vpop.f32.mrb[0].mxu0
        %v515 = vadd.f32 %v427, %v514
        %v516 = vpop.f32.mrb[0].mxu0
        %v517 = vpop.f32.mrb[0].mxu0
        %v518 = vpop.f32.mrb[0].mxu0
        %519 = vdwg.mxu0
        %v521 = vsel %vm255, %v415, 0
        %523 = vmatprep.subr.bf16.mxu0 0
        %524 = vmatpush1.bf16.msra.mxu0 %v412
        %525 = vmatprep.subr.bf16.mxu0 0
        %526 = vmatpush1.bf16.msra.mxu0 0
        %527 = vmatprep.subr.bf16.mxu0 0
        %528 = vmatpush1.bf16.msra.mxu0 0
        %529 = vmatprep.subr.bf16.mxu0 0
        %530 = vmatpush1.bf16.msra.mxu0 0
        %531 = vmatprep.subr.bf16.mxu0 0
        %532 = vmatpush1.bf16.msra.mxu0 0
        %533 = vmatprep.subr.bf16.mxu0 0
        %534 = vmatpush1.bf16.msra.mxu0 0
        %535 = vmatprep.subr.bf16.mxu0 0
        %536 = vmatpush1.bf16.msra.mxu0 0
        %537 = vmatprep.subr.bf16.mxu0 0
        %538 = vmatpush1.bf16.msra.mxu0 0
        %539 = vmatprep.subr.bf16.mxu0 0
        %540 = vmatpush1.bf16.msra.mxu0 0
        %541 = vmatprep.subr.bf16.mxu0 0
        %542 = vmatpush1.bf16.msra.mxu0 0
        %543 = vmatprep.subr.bf16.mxu0 0
        %544 = vmatpush1.bf16.msra.mxu0 0
        %545 = vmatprep.subr.bf16.mxu0 0
        %546 = vmatpush1.bf16.msra.mxu0 0
        %547 = vmatprep.subr.bf16.mxu0 0
        %548 = vmatpush1.bf16.msra.mxu0 0
        %549 = vmatprep.subr.bf16.mxu0 0
        %550 = vmatpush1.bf16.msra.mxu0 0
        %551 = vmatprep.subr.bf16.mxu0 0
        %552 = vmatpush1.bf16.msra.mxu0 0
        %553 = vmatprep.subr.bf16.mxu0 0
        %554 = vmatpush1.bf16.msra.mxu0 0
        %555 = vmatprep.mubr.bf16.mxu0 0
        %556 = vmatmul.mubr.bf16.gmra.mrb[0].mxu0 %v521
        %v557 = vpop.f32.mrb[0].mxu0
        %v558 = vadd.f32 %v432, %v557
        %v559 = vpop.f32.mrb[0].mxu0
        %v560 = vpop.f32.mrb[0].mxu0
        %v561 = vpop.f32.mrb[0].mxu0
        %562 = vdwg.mxu0
        %563 = vst [vmem:[%s230] sm:$0xff] %v472
        %564 = vst [vmem:[%s230 + $0x8] sm:$0xff] %v515
        %565 = vst [vmem:[%s230 + $0x10] sm:$0xff] %v558
        %s566 = sand.u32 %s119, 1
        %s567 = scalar_lea.sflag [#allocation4], %s566
        %s568 = sand.u32 %s119, 1
        %s569 = smul.addr %s568, 24
        %s570 = scalar_lea.vmem [#allocation7], %s569
        // Predicated region
        $region45: #{tpu_custom_call.1} parent=35 // pred_check
          %p571 = pneg %p129
        $region46: #{tpu_custom_call.1} parent=35 // pred_check_branch
          %573 = sbr.rel (%p571) target = $region48
        $region47: #{tpu_custom_call.1} parent=35 // pred_region
          %s575 = ssub.s32 384, 384
          %576 = vsyncadd %s567, %s575
          %s577 = smul.addr %s22, 3
          %s578 = smul.addr %s577, 128
          %s579 = scalar_lea.hbm %s4, %s578
          %s580 = sshll.u32 %s570, 4
          %s581 = int_to_ptr.vmem [resolvable:$true] %s580
          %586 = dma.vmem_to_hbm [thread:$0]  %s581, 384, %s579, %s567, 128, 128, 8
        $region48: #{tpu_custom_call.1} parent=35 // pred_fallthru
          _
      $region36: #{tpu_custom_call.1} parent=5 // pred_fallthru
        _
      %p587 = scmp.le.s32.totalorder 2, %s17
      // Predicated region
      $region49: #{tpu_custom_call.1} parent=5 // pred_check
        %p588 = pneg %p587
      $region50: #{tpu_custom_call.1} parent=5 // pred_check_branch
        %590 = sbr.rel (%p588) target = $region52
      $region51: #{tpu_custom_call.1} parent=5 // pred_region
        %s591 = ssub.s32 %s17, 2
        // Predicated region
        $region53: #{tpu_custom_call.1} parent=51 // pred_check
          %p592 = pneg %p135
        $region54: #{tpu_custom_call.1} parent=51 // pred_check_branch
          %594 = sbr.rel (%p592) target = $region56
        $region55: #{tpu_custom_call.1} parent=51 // pred_region
          %s595 = sand.u32 %s120, 1
          %s596 = scalar_lea.sflag [#allocation4], %s595
          %s597 = sand.u32 %s120, 1
          %s598 = smul.addr %s597, 24
          %s599 = scalar_lea.vmem [#allocation7], %s598
          %600 = dma.done %s596, 384
        $region56: #{tpu_custom_call.1} parent=51 // pred_fallthru
          _
      $region52: #{tpu_custom_call.1} parent=5 // pred_fallthru
        _
    $region6: #{tpu_custom_call.1} parent=1 // loop_footer
      %s21 = sadd.s32 1, %s17
    $region7: #{tpu_custom_call.1} parent=1 // loop_footer_branch
      %16 = sbr.rel target = $region3
    $region8: #{tpu_custom_call.1} parent=1 // loop_exit
      _
    %601 = vsyncpa [#allocation3], 1
    %s602 = scalar_lea.sflag [#allocation3], 1
    %603 = vsyncpa %s602, 1
    %604 = vsyncpa [#allocation6], 1
    %605 = vsyncpa [#allocation4], 1
    %s606 = scalar_lea.sflag [#allocation4], 1
    %607 = vsyncpa %s606, 1

</llo_original>
